<compile_context>
chip_gen: v6e
topology: v6e:2x2x1
jax: 0.10.0
libtpu: 0.0.40
codegen_flags: <defaults>
</compile_context>

<pallas_src>
import numpy as np
import jax
import jax.numpy as jnp
from jax import lax
from jax.experimental import pallas as pl
from jax.experimental.pallas import tpu as pltpu


# ---------------------------------------------------------------------------
# Config (mirrors BGNetwork.__init__ arguments)
# ---------------------------------------------------------------------------
NUM_ARMS = 4
STN_NEURONS = 8        # d2_gpi / D2_pathway exist in __init__ but are never
MAX_GPI_ITERS = 8      # used in forward() -> not computed here either.
D1_AMP = 1.0
D2_AMP = 1.0
GPI_THRESHOLD = 1e-4
GPI_VAR = 1e-4         # used as the *std* multiplier, exactly like the torch code
GPI_MEAN = 0.5
TAU_GPI = 0.1
DT = 0.01

LANES = 128
ROWS = 8               # every operand / the output is exactly one (8,128) f32 vreg tile
assert MAX_GPI_ITERS <= ROWS

# --- constant-tile layout (packed ONCE host-side, reused every call) ---------
COL_DP = 0             # lanes 0..3, every row : dp = d1_amp * D1_pathway(ones)
COL_VALUE = 4          # lane 4,    every row : value = snc(D1_output)   (no sigmoid)
COL_WTRI = 8           # lanes 8..15, rows 0..7: Wtri[k,j] = coef*(1-coef)^(k-j), j<=k

# --- output-tile layout: one (8,128) unmasked store; wrapper unpacks ----------
OUT_ROW_V = 0          # lanes 0..3 : -v_gpi (selected step)
OUT_ROW_DP = 1         # lanes 0..3 : dp_output
OUT_ROW_IP = 2         # lanes 0..3 : ip_output (selected step)
OUT_ROW_MISC = 3       # lane 4: value, lane 5: t (as f32; exact for T <= 8)
LANE_T = 5


# ---------------------------------------------------------------------------
# Pallas kernel: GPi integration (closed form) + early-break selection + packed
# output composition.  Everything else of BGNetwork.forward is parameter-only
# and lives in pack_const().
# ---------------------------------------------------------------------------
def _bg_kernel(const_ref, noise_ref, out_ref):
    f32 = jnp.float32
    T, A = MAX_GPI_ITERS, NUM_ARMS

    c = const_ref[...]                       # (8,128) constants (dp, value, Wtri)
    noise = noise_ref[...]                   # (8,128); lanes 0..3 = per-step gaussian

    lane2 = lax.broadcasted_iota(jnp.int32, (ROWS, LANES), 1)
    lane1 = lax.broadcasted_iota(jnp.int32, (1, LANES), 1)
    arm2 = lane2 < A                         # lanes 0..3 (the arms)
    arm1 = lane1 < A

    # indirect-pathway drive per step: torch.round(d2_amp * (noise*std + mean), 2)
    ip = jnp.round(D2_AMP * (noise * GPI_VAR + GPI_MEAN) * 100.0) / 100.0
    ip = jnp.where(arm2, ip, 0.0)            # (8,128), valid in lanes 0..3

    # Closed form of v_k = (1-coef) v_{k-1} + coef (ip_k - dp), v_0 = 0:
    #   V = Wtri @ (ip - dp),  Wtri[k,j] = coef*(1-coef)^(k-j)  (coef folded in),
    # realized as T independent broadcast FMAs (no scratch, no serial store chain).
    diff = jnp.where(arm2, ip - c, 0.0)      # c lanes 0..3 hold dp (replicated per row)
    V = jnp.zeros((ROWS, LANES), f32)
    for j in range(T):
        wcol = const_ref[0:ROWS, COL_WTRI + j:COL_WTRI + j + 1]   # (8,1) = Wtri[:, j]
        V = V + wcol * diff[j:j + 1, :]
    neg_v = -V                               # -v after steps 1..T (lanes 0..3)

    # earliest step with max(-v) > threshold  ==  torch's early `break`
    row_max = jnp.max(jnp.where(arm2, neg_v, -1.0), axis=-1, keepdims=True)  # (8,1)
    row_f = lax.broadcasted_iota(jnp.int32, (ROWS, 1), 0).astype(f32)
    hits = row_max > f32(GPI_THRESHOLD)
    first = jnp.min(jnp.where(hits, row_f, f32(T)))    # scalar: first hit (or T)
    t_f = jnp.minimum(first + 1.0, f32(T))             # iterations actually run
    idx = jnp.minimum(first, f32(T - 1))                # selected 0-based step
    sel = (row_f == idx).astype(f32)                    # (8,1) one-hot

    # one-hot sublane selects of the break-step state (single XLU reduce each)
    v_row = jnp.sum(neg_v * sel, axis=0, keepdims=True)   # (1,128): -v_gpi
    ip_row = jnp.sum(ip * sel, axis=0, keepdims=True)     # (1,128): ip_output
    dp_row = jnp.where(arm1, c[0:1, :], 0.0)               # (1,128): dp_output
    misc_row = (jnp.where(lane1 == COL_VALUE, c[0:1, :], 0.0)   # value @ lane 4
                + jnp.where(lane1 == LANE_T, t_f, 0.0))         # t     @ lane 5

    # compose all five outputs in registers; ONE unmasked full-tile store
    srow = lax.broadcasted_iota(jnp.int32, (ROWS, LANES), 0)
    out_ref[...] = (jnp.where(srow == OUT_ROW_V, v_row, 0.0)
                    + jnp.where(srow == OUT_ROW_DP, dp_row, 0.0)
                    + jnp.where(srow == OUT_ROW_IP, ip_row, 0.0)
                    + jnp.where(srow == OUT_ROW_MISC, misc_row, 0.0))


# ---------------------------------------------------------------------------
# Parameters (BGNetwork._initialize_weights: every Linear weight/bias = 0.001)
# ---------------------------------------------------------------------------
def make_params():
    c = 0.001
    return dict(
        w_str=jnp.full((NUM_ARMS, NUM_ARMS), c, jnp.float32),
        b_str=jnp.full((NUM_ARMS,), c, jnp.float32),
        w_d1gpi=jnp.full((NUM_ARMS, NUM_ARMS), c, jnp.float32),
        b_d1gpi=jnp.full((NUM_ARMS,), c, jnp.float32),
        w_snc=jnp.full((1, NUM_ARMS), c, jnp.float32),
        b_snc=jnp.full((1,), c, jnp.float32),
    )


def pack_const(params):
    """One-time host-side packing of everything that does not depend on noise.

    forward() feeds the constant ones vector through str_d1/d1_gpi/snc, so dp
    and value are pure functions of the params; they are precomputed here
    together with the coef-folded lower-triangular GPi propagator Wtri.
    """
    A, T = NUM_ARMS, MAX_GPI_ITERS
    x = jnp.ones((1, A), jnp.float32)
    h = jax.nn.sigmoid(x @ params["w_str"].T + params["b_str"][None, :])
    d1 = jax.nn.sigmoid(h @ params["w_d1gpi"].T + params["b_d1gpi"][None, :])
    dp = D1_AMP * d1                                              # (1, A)
    value = d1 @ params["w_snc"].T + params["b_snc"][None, :]     # (1, 1), NO sigmoid

    coef = DT / TAU_GPI
    keep = 1.0 - coef
    k = np.arange(T)
    pw = k[:, None] - k[None, :]
    wtri = np.where(pw >= 0, coef * np.power(keep, np.maximum(pw, 0)), 0.0)

    buf = np.zeros((ROWS, LANES), np.float32)
    buf[:, COL_DP:COL_DP + A] = np.asarray(dp, np.float32)[0]     # replicated per row
    buf[:, COL_VALUE] = float(value[0, 0])                        # replicated per row
    buf[:T, COL_WTRI:COL_WTRI + T] = wtri.astype(np.float32)
    return jnp.asarray(buf)


@jax.jit
def bg_network_forward(stn_input, const_tile, noise):
    """Pallas forward pass of BGNetwork.

    `stn_input` is accepted for API parity with the torch module but — exactly
    like the torch forward() — it is never read.  `noise` is one (8,128) f32
    gaussian tile; lanes 0..3 are the per-iteration D2 draw (torch draws it
    inside the loop; RNG stream semantics therefore differ by construction).
    """
    del stn_input  # unused by the reference forward as well
    vmem = pl.BlockSpec(memory_space=pltpu.MemorySpace.VMEM)
    out = pl.pallas_call(
        _bg_kernel,
        out_shape=jax.ShapeDtypeStruct((ROWS, LANES), jnp.float32),
        in_specs=[vmem, vmem],          # two independent inbound DMAs
        out_specs=vmem,                 # one outbound DMA
    )(const_tile, noise)

    v_gpi_out = out[OUT_ROW_V:OUT_ROW_V + 1, 0:NUM_ARMS]
    dp_output = out[OUT_ROW_DP:OUT_ROW_DP + 1, 0:NUM_ARMS]
    ip_output = out[OUT_ROW_IP:OUT_ROW_IP + 1, 0:NUM_ARMS]
    value = out[OUT_ROW_MISC:OUT_ROW_MISC + 1, COL_VALUE:COL_VALUE + 1]
    t = out[OUT_ROW_MISC, LANE_T].astype(jnp.int32)   # exact for T <= 8
    return v_gpi_out, t, dp_output, ip_output, value


# ---------------------------------------------------------------------------
# Pure numpy reference (mirrors the torch forward loop exactly)
# ---------------------------------------------------------------------------
def reference_forward(params, noise):
    def lin(x, w, b):
        return x @ np.asarray(w, np.float32).T + np.asarray(b, np.float32).reshape(1, -1)

    def sig(x):
        return 1.0 / (1.0 + np.exp(-x))

    inp = np.ones((1, NUM_ARMS), np.float32)
    h = sig(lin(inp, params["w_str"], params["b_str"]))
    d1 = sig(lin(h, params["w_d1gpi"], params["b_d1gpi"]))
    value = lin(d1, params["w_snc"], params["b_snc"])

    noise = np.asarray(noise, np.float32)
    v = np.zeros((1, NUM_ARMS), np.float32)
    d2 = np.zeros((1, NUM_ARMS), np.float32)
    t = 0
    while t < MAX_GPI_ITERS:
        d2 = noise[t:t + 1] * GPI_VAR + GPI_MEAN
        ip = np.round(D2_AMP * d2 * 100.0) / 100.0
        v = v + DT / TAU_GPI * (-v - D1_AMP * d1 + ip)
        t += 1
        if np.max(-v) > GPI_THRESHOLD:
            break
    return (-v, t, D1_AMP * d1, np.round(D2_AMP * d2 * 100.0) / 100.0, value)


if __name__ == "__main__":
    key = jax.random.PRNGKey(0)
    k_stn, k_noise = jax.random.split(key)
    # torch forward signature: stn_input of shape (1, time_points, num_neurons)
    stn_input = jax.random.normal(k_stn, (1, MAX_GPI_ITERS, STN_NEURONS), jnp.float32)
    # one (8,128) gaussian tile; lanes 0..3 are the per-iteration D2 noise
    noise = jax.random.normal(k_noise, (ROWS, LANES), jnp.float32)
    params = make_params()
    const_tile = pack_const(params)

    outs = jax.block_until_ready(bg_network_forward(stn_input, const_tile, noise))
    v_gpi_out, t, dp_output, ip_output, value = outs

    ref_v, ref_t, ref_dp, ref_ip, ref_val = reference_forward(
        params, np.asarray(noise)[:MAX_GPI_ITERS, :NUM_ARMS])
    assert int(t) == int(ref_t), (int(t), int(ref_t))
    np.testing.assert_allclose(np.asarray(v_gpi_out), ref_v, rtol=1e-5, atol=1e-6)
    np.testing.assert_allclose(np.asarray(dp_output), ref_dp, rtol=1e-5, atol=1e-6)
    np.testing.assert_allclose(np.asarray(ip_output), ref_ip, rtol=1e-5, atol=1e-6)
    np.testing.assert_allclose(np.asarray(value), ref_val, rtol=1e-5, atol=1e-6)
    print("KERNEL_OK")
</pallas_src>

<mosaic_0001>
module attributes {stable_mosaic.version = 11 : i64} {
  func.func @_bg_kernel(%arg0: memref<8x128xf32, #tpu.memory_space<vmem>>, %arg1: memref<8x128xf32, #tpu.memory_space<vmem>>, %arg2: memref<8x128xf32, #tpu.memory_space<vmem>>) attributes {dimension_semantics = [], scalar_prefetch = 0 : i64, scratch_operands = 0 : i64, tpu.core_type = #tpu.core_type<tc>} {
    %c0 = arith.constant 0 : index
    %c0_0 = arith.constant 0 : index
    %0 = vector.load %arg0[%c0, %c0_0] : memref<8x128xf32, #tpu.memory_space<vmem>>, vector<8x128xf32>
    %c0_1 = arith.constant 0 : index
    %c0_2 = arith.constant 0 : index
    %1 = vector.load %arg1[%c0_1, %c0_2] : memref<8x128xf32, #tpu.memory_space<vmem>>, vector<8x128xf32>
    %2 = tpu.iota {dimensions = array<i32: 1>} : vector<8x128xi32>
    %3 = tpu.iota {dimensions = array<i32: 1>} : vector<1x128xi32>
    %c4_i32 = arith.constant 4 : i32
    %4 = vector.broadcast %c4_i32 : i32 to vector<8x128xi32>
    %5 = arith.cmpi slt, %2, %4 : vector<8x128xi32>
    %c4_i32_3 = arith.constant 4 : i32
    %6 = vector.broadcast %c4_i32_3 : i32 to vector<1x128xi32>
    %7 = arith.cmpi slt, %3, %6 : vector<1x128xi32>
    %cst = arith.constant 9.99999974E-5 : f32
    %8 = vector.broadcast %cst : f32 to vector<8x128xf32>
    %9 = arith.mulf %1, %8 : vector<8x128xf32>
    %cst_4 = arith.constant 5.000000e-01 : f32
    %10 = vector.broadcast %cst_4 : f32 to vector<8x128xf32>
    %11 = arith.addf %9, %10 : vector<8x128xf32>
    %cst_5 = arith.constant 1.000000e+00 : f32
    %12 = vector.broadcast %cst_5 : f32 to vector<8x128xf32>
    %13 = arith.mulf %12, %11 : vector<8x128xf32>
    %cst_6 = arith.constant 1.000000e+02 : f32
    %14 = vector.broadcast %cst_6 : f32 to vector<8x128xf32>
    %15 = arith.mulf %13, %14 : vector<8x128xf32>
    %16 = math.roundeven %15 : vector<8x128xf32>
    %cst_7 = arith.constant 1.000000e+02 : f32
    %17 = vector.broadcast %cst_7 : f32 to vector<8x128xf32>
    %18 = arith.divf %16, %17 : vector<8x128xf32>
    %cst_8 = arith.constant 0.000000e+00 : f32
    %19 = vector.broadcast %cst_8 : f32 to vector<8x128xf32>
    %20 = arith.select %5, %18, %19 : vector<8x128xi1>, vector<8x128xf32>
    %21 = arith.subf %20, %0 : vector<8x128xf32>
    %cst_9 = arith.constant 0.000000e+00 : f32
    %22 = vector.broadcast %cst_9 : f32 to vector<8x128xf32>
    %23 = arith.select %5, %21, %22 : vector<8x128xi1>, vector<8x128xf32>
    %cst_10 = arith.constant 0.000000e+00 : f32
    %24 = vector.broadcast %cst_10 : f32 to vector<8x128xf32>
    %c0_11 = arith.constant 0 : index
    %c8 = arith.constant 8 : index
    %25 = vector.load %arg0[%c0_11, %c8] : memref<8x128xf32, #tpu.memory_space<vmem>>, vector<8x1xf32>
    %26 = vector.extract_strided_slice %23 {offsets = [0, 0], sizes = [1, 128], strides = [1, 1]} : vector<8x128xf32> to vector<1x128xf32>
    %27 = vector.broadcast %25 : vector<8x1xf32> to vector<8x128xf32>
    %28 = vector.broadcast %26 : vector<1x128xf32> to vector<8x128xf32>
    %29 = arith.mulf %27, %28 : vector<8x128xf32>
    %30 = arith.addf %24, %29 : vector<8x128xf32>
    %c0_12 = arith.constant 0 : index
    %c9 = arith.constant 9 : index
    %31 = vector.load %arg0[%c0_12, %c9] : memref<8x128xf32, #tpu.memory_space<vmem>>, vector<8x1xf32>
    %32 = vector.extract_strided_slice %23 {offsets = [1, 0], sizes = [1, 128], strides = [1, 1]} : vector<8x128xf32> to vector<1x128xf32>
    %33 = vector.broadcast %31 : vector<8x1xf32> to vector<8x128xf32>
    %34 = vector.broadcast %32 : vector<1x128xf32> to vector<8x128xf32>
    %35 = arith.mulf %33, %34 : vector<8x128xf32>
    %36 = arith.addf %30, %35 : vector<8x128xf32>
    %c0_13 = arith.constant 0 : index
    %c10 = arith.constant 10 : index
    %37 = vector.load %arg0[%c0_13, %c10] : memref<8x128xf32, #tpu.memory_space<vmem>>, vector<8x1xf32>
    %38 = vector.extract_strided_slice %23 {offsets = [2, 0], sizes = [1, 128], strides = [1, 1]} : vector<8x128xf32> to vector<1x128xf32>
    %39 = vector.broadcast %37 : vector<8x1xf32> to vector<8x128xf32>
    %40 = vector.broadcast %38 : vector<1x128xf32> to vector<8x128xf32>
    %41 = arith.mulf %39, %40 : vector<8x128xf32>
    %42 = arith.addf %36, %41 : vector<8x128xf32>
    %c0_14 = arith.constant 0 : index
    %c11 = arith.constant 11 : index
    %43 = vector.load %arg0[%c0_14, %c11] : memref<8x128xf32, #tpu.memory_space<vmem>>, vector<8x1xf32>
    %44 = vector.extract_strided_slice %23 {offsets = [3, 0], sizes = [1, 128], strides = [1, 1]} : vector<8x128xf32> to vector<1x128xf32>
    %45 = vector.broadcast %43 : vector<8x1xf32> to vector<8x128xf32>
    %46 = vector.broadcast %44 : vector<1x128xf32> to vector<8x128xf32>
    %47 = arith.mulf %45, %46 : vector<8x128xf32>
    %48 = arith.addf %42, %47 : vector<8x128xf32>
    %c0_15 = arith.constant 0 : index
    %c12 = arith.constant 12 : index
    %49 = vector.load %arg0[%c0_15, %c12] : memref<8x128xf32, #tpu.memory_space<vmem>>, vector<8x1xf32>
    %50 = vector.extract_strided_slice %23 {offsets = [4, 0], sizes = [1, 128], strides = [1, 1]} : vector<8x128xf32> to vector<1x128xf32>
    %51 = vector.broadcast %49 : vector<8x1xf32> to vector<8x128xf32>
    %52 = vector.broadcast %50 : vector<1x128xf32> to vector<8x128xf32>
    %53 = arith.mulf %51, %52 : vector<8x128xf32>
    %54 = arith.addf %48, %53 : vector<8x128xf32>
    %c0_16 = arith.constant 0 : index
    %c13 = arith.constant 13 : index
    %55 = vector.load %arg0[%c0_16, %c13] : memref<8x128xf32, #tpu.memory_space<vmem>>, vector<8x1xf32>
    %56 = vector.extract_strided_slice %23 {offsets = [5, 0], sizes = [1, 128], strides = [1, 1]} : vector<8x128xf32> to vector<1x128xf32>
    %57 = vector.broadcast %55 : vector<8x1xf32> to vector<8x128xf32>
    %58 = vector.broadcast %56 : vector<1x128xf32> to vector<8x128xf32>
    %59 = arith.mulf %57, %58 : vector<8x128xf32>
    %60 = arith.addf %54, %59 : vector<8x128xf32>
    %c0_17 = arith.constant 0 : index
    %c14 = arith.constant 14 : index
    %61 = vector.load %arg0[%c0_17, %c14] : memref<8x128xf32, #tpu.memory_space<vmem>>, vector<8x1xf32>
    %62 = vector.extract_strided_slice %23 {offsets = [6, 0], sizes = [1, 128], strides = [1, 1]} : vector<8x128xf32> to vector<1x128xf32>
    %63 = vector.broadcast %61 : vector<8x1xf32> to vector<8x128xf32>
    %64 = vector.broadcast %62 : vector<1x128xf32> to vector<8x128xf32>
    %65 = arith.mulf %63, %64 : vector<8x128xf32>
    %66 = arith.addf %60, %65 : vector<8x128xf32>
    %c0_18 = arith.constant 0 : index
    %c15 = arith.constant 15 : index
    %67 = vector.load %arg0[%c0_18, %c15] : memref<8x128xf32, #tpu.memory_space<vmem>>, vector<8x1xf32>
    %68 = vector.extract_strided_slice %23 {offsets = [7, 0], sizes = [1, 128], strides = [1, 1]} : vector<8x128xf32> to vector<1x128xf32>
    %69 = vector.broadcast %67 : vector<8x1xf32> to vector<8x128xf32>
    %70 = vector.broadcast %68 : vector<1x128xf32> to vector<8x128xf32>
    %71 = arith.mulf %69, %70 : vector<8x128xf32>
    %72 = arith.addf %66, %71 : vector<8x128xf32>
    %cst_19 = arith.constant 0.000000e+00 : f32
    %73 = vector.broadcast %cst_19 : f32 to vector<8x128xf32>
    %74 = arith.subf %73, %72 : vector<8x128xf32>
    %cst_20 = arith.constant -1.000000e+00 : f32
    %75 = vector.broadcast %cst_20 : f32 to vector<8x128xf32>
    %76 = arith.select %5, %74, %75 : vector<8x128xi1>, vector<8x128xf32>
    %cst_21 = arith.constant dense<0xFF800000> : vector<8xf32>
    %77 = vector.multi_reduction <maximumf>, %76, %cst_21 [1] : vector<8x128xf32> to vector<8xf32>
    %78 = vector.shape_cast %77 : vector<8xf32> to vector<8x1xf32>
    %79 = tpu.iota {dimensions = array<i32: 0>} : vector<8x1xi32>
    %80 = arith.sitofp %79 : vector<8x1xi32> to vector<8x1xf32>
    %cst_22 = arith.constant 9.99999974E-5 : f32
    %81 = vector.broadcast %cst_22 : f32 to vector<8x1xf32>
    %82 = arith.cmpf ogt, %78, %81 : vector<8x1xf32>
    %cst_23 = arith.constant 8.000000e+00 : f32
    %83 = vector.broadcast %cst_23 : f32 to vector<8x1xf32>
    %84 = arith.select %82, %80, %83 : vector<8x1xi1>, vector<8x1xf32>
    %85 = vector.shape_cast %84 : vector<8x1xf32> to vector<1x8x1xf32>
    %cst_24 = arith.constant dense<0x7F800000> : vector<1xf32>
    %86 = vector.multi_reduction <minimumf>, %85, %cst_24 [1, 2] : vector<1x8x1xf32> to vector<1xf32>
    %87 = vector.shape_cast %86 : vector<1xf32> to vector<1x1x1xf32>
    %88 = vector.extract %87[0, 0, 0] : f32 from vector<1x1x1xf32>
    %cst_25 = arith.constant 1.000000e+00 : f32
    %89 = arith.addf %88, %cst_25 : f32
    %cst_26 = arith.constant 8.000000e+00 : f32
    %90 = arith.minimumf %89, %cst_26 : f32
    %cst_27 = arith.constant 7.000000e+00 : f32
    %91 = arith.minimumf %88, %cst_27 : f32
    %92 = vector.broadcast %91 : f32 to vector<8x1xf32>
    %93 = arith.cmpf oeq, %80, %92 : vector<8x1xf32>
    %94 = arith.extui %93 : vector<8x1xi1> to vector<8x1xi32>
    %95 = arith.sitofp %94 : vector<8x1xi32> to vector<8x1xf32>
    %96 = vector.broadcast %95 : vector<8x1xf32> to vector<8x128xf32>
    %97 = arith.mulf %74, %96 : vector<8x128xf32>
    %cst_28 = arith.constant dense<0.000000e+00> : vector<128xf32>
    %98 = vector.multi_reduction <add>, %97, %cst_28 [0] : vector<8x128xf32> to vector<128xf32>
    %99 = vector.shape_cast %98 : vector<128xf32> to vector<1x128xf32>
    %100 = vector.broadcast %95 : vector<8x1xf32> to vector<8x128xf32>
    %101 = arith.mulf %20, %100 : vector<8x128xf32>
    %cst_29 = arith.constant dense<0.000000e+00> : vector<128xf32>
    %102 = vector.multi_reduction <add>, %101, %cst_29 [0] : vector<8x128xf32> to vector<128xf32>
    %103 = vector.shape_cast %102 : vector<128xf32> to vector<1x128xf32>
    %104 = vector.extract_strided_slice %0 {offsets = [0, 0], sizes = [1, 128], strides = [1, 1]} : vector<8x128xf32> to vector<1x128xf32>
    %cst_30 = arith.constant 0.000000e+00 : f32
    %105 = vector.broadcast %cst_30 : f32 to vector<1x128xf32>
    %106 = arith.select %7, %104, %105 : vector<1x128xi1>, vector<1x128xf32>
    %c4_i32_31 = arith.constant 4 : i32
    %107 = vector.broadcast %c4_i32_31 : i32 to vector<1x128xi32>
    %108 = arith.cmpi eq, %3, %107 : vector<1x128xi32>
    %109 = vector.extract_strided_slice %0 {offsets = [0, 0], sizes = [1, 128], strides = [1, 1]} : vector<8x128xf32> to vector<1x128xf32>
    %cst_32 = arith.constant 0.000000e+00 : f32
    %110 = vector.broadcast %cst_32 : f32 to vector<1x128xf32>
    %111 = arith.select %108, %109, %110 : vector<1x128xi1>, vector<1x128xf32>
    %c5_i32 = arith.constant 5 : i32
    %112 = vector.broadcast %c5_i32 : i32 to vector<1x128xi32>
    %113 = arith.cmpi eq, %3, %112 : vector<1x128xi32>
    %cst_33 = arith.constant 0.000000e+00 : f32
    %114 = vector.broadcast %90 : f32 to vector<1x128xf32>
    %115 = vector.broadcast %cst_33 : f32 to vector<1x128xf32>
    %116 = arith.select %113, %114, %115 : vector<1x128xi1>, vector<1x128xf32>
    %117 = arith.addf %111, %116 : vector<1x128xf32>
    %118 = tpu.iota {dimensions = array<i32: 0>} : vector<8x128xi32>
    %c0_i32 = arith.constant 0 : i32
    %119 = vector.broadcast %c0_i32 : i32 to vector<8x128xi32>
    %120 = arith.cmpi eq, %118, %119 : vector<8x128xi32>
    %cst_34 = arith.constant 0.000000e+00 : f32
    %121 = vector.shape_cast %99 : vector<1x128xf32> to vector<1x128xf32>
    %122 = vector.broadcast %121 : vector<1x128xf32> to vector<8x128xf32>
    %123 = vector.broadcast %cst_34 : f32 to vector<8x128xf32>
    %124 = arith.select %120, %122, %123 : vector<8x128xi1>, vector<8x128xf32>
    %c1_i32 = arith.constant 1 : i32
    %125 = vector.broadcast %c1_i32 : i32 to vector<8x128xi32>
    %126 = arith.cmpi eq, %118, %125 : vector<8x128xi32>
    %cst_35 = arith.constant 0.000000e+00 : f32
    %127 = vector.shape_cast %106 : vector<1x128xf32> to vector<1x128xf32>
    %128 = vector.broadcast %127 : vector<1x128xf32> to vector<8x128xf32>
    %129 = vector.broadcast %cst_35 : f32 to vector<8x128xf32>
    %130 = arith.select %126, %128, %129 : vector<8x128xi1>, vector<8x128xf32>
    %131 = arith.addf %124, %130 : vector<8x128xf32>
    %c2_i32 = arith.constant 2 : i32
    %132 = vector.broadcast %c2_i32 : i32 to vector<8x128xi32>
    %133 = arith.cmpi eq, %118, %132 : vector<8x128xi32>
    %cst_36 = arith.constant 0.000000e+00 : f32
    %134 = vector.shape_cast %103 : vector<1x128xf32> to vector<1x128xf32>
    %135 = vector.broadcast %134 : vector<1x128xf32> to vector<8x128xf32>
    %136 = vector.broadcast %cst_36 : f32 to vector<8x128xf32>
    %137 = arith.select %133, %135, %136 : vector<8x128xi1>, vector<8x128xf32>
    %138 = arith.addf %131, %137 : vector<8x128xf32>
    %c3_i32 = arith.constant 3 : i32
    %139 = vector.broadcast %c3_i32 : i32 to vector<8x128xi32>
    %140 = arith.cmpi eq, %118, %139 : vector<8x128xi32>
    %cst_37 = arith.constant 0.000000e+00 : f32
    %141 = vector.shape_cast %117 : vector<1x128xf32> to vector<1x128xf32>
    %142 = vector.broadcast %141 : vector<1x128xf32> to vector<8x128xf32>
    %143 = vector.broadcast %cst_37 : f32 to vector<8x128xf32>
    %144 = arith.select %140, %142, %143 : vector<8x128xi1>, vector<8x128xf32>
    %145 = arith.addf %138, %144 : vector<8x128xf32>
    %c0_38 = arith.constant 0 : index
    %c0_39 = arith.constant 0 : index
    %146 = vector.load %arg2[%c0_38, %c0_39] : memref<8x128xf32, #tpu.memory_space<vmem>>, vector<8x128xf32>
    tpu.vector_store %arg2[%c0_38, %c0_39], %145 {strides = array<i32>} : memref<8x128xf32, #tpu.memory_space<vmem>>, vector<8x128xf32>,
    return
  }
}

</mosaic_0001>

<llo_original>
// kernel: bg_network_forward.1
$region0: #{bg_network_forward.1}
  #allocation0 [shape = 'u32[]', space=smem, size = 0x4, offset = 0x4, fixed_abs, tag = 'smem constant byte address 0x4 - core index']
  #allocation1 [shape = 'u32[144,128]{1,0:T(1,128)}', space=vmem, size = 0x12000, scoped, tag = 'internal scratch']
  %s0 = inlined_call_operand.hbm [shape: f32[8,128], index: 0, kind: input, shape index: {}]
  %s1 = inlined_call_operand.hbm [shape: f32[8,128], index: 1, kind: input, shape index: {}]
  %s2 = inlined_call_operand.vmem [shape: f32[8,128], index: 2, kind: output, shape index: {}]
  %s3 = sld [smem:[#allocation0]]
  $region26: #{bg_network_forward.1} parent=0
    _
  %s5 = ssub.s32 1, %s3
  %s6 = scalar_select 0, %s5, %s3
  $region1: #{bg_network_forward.1} parent=0
    #allocation2 [shape = 'u8[4096]{0}', space=vmem, size = 0x1000, scoped, tag = 'input window, operand 0, single buffered']
    #allocation3 [shape = 's32[1]{0}', space=sflag, size = 0x4, scoped, tag = 'scoped memory for bg_network_forward.1']
    #allocation4 [shape = 'u8[4096]{0}', space=vmem, size = 0x1000, scoped, tag = 'input window, operand 1, single buffered']
    #allocation5 [shape = 's32[1]{0}', space=sflag, size = 0x4, scoped, tag = 'scoped memory for bg_network_forward.1']
    %7 = vsyncpa [#allocation3], 0
    %8 = vsyncpa [#allocation5], 0
    // Predicated region
    $region2: #{bg_network_forward.1} parent=1 // pred_check
      _
    $region3: #{bg_network_forward.1} parent=1 // pred_check_branch
      %10 = sbr.rel (0) target = $region5
    $region4: #{bg_network_forward.1} parent=1 // pred_region
      %s12 = ssub.s32 128, 128
      %13 = vsyncadd [#allocation3], %s12
      %s15 = sshll.u32 [#allocation2], 4
      %s16 = int_to_ptr.vmem [resolvable:$true] %s15
      %18 = dma.hbm_to_vmem [thread:$0]  %s0, 128, %s16, [#allocation3]
    $region5: #{bg_network_forward.1} parent=1 // pred_fallthru
      _
    // Predicated region
    $region6: #{bg_network_forward.1} parent=1 // pred_check
      _
    $region7: #{bg_network_forward.1} parent=1 // pred_check_branch
      %20 = sbr.rel (0) target = $region9
    $region8: #{bg_network_forward.1} parent=1 // pred_region
      %s22 = ssub.s32 128, 128
      %23 = vsyncadd [#allocation5], %s22
      %s25 = sshll.u32 [#allocation4], 4
      %s26 = int_to_ptr.vmem [resolvable:$true] %s25
      %28 = dma.hbm_to_vmem [thread:$0]  %s1, 128, %s26, [#allocation5]
    $region9: #{bg_network_forward.1} parent=1 // pred_fallthru
      _
    // Predicated region
    $region10: #{bg_network_forward.1} parent=1 // pred_check
      _
    $region11: #{bg_network_forward.1} parent=1 // pred_check_branch
      %30 = sbr.rel (0) target = $region13
    $region12: #{bg_network_forward.1} parent=1 // pred_region
      %31 = dma.done [#allocation3], 128
    $region13: #{bg_network_forward.1} parent=1 // pred_fallthru
      _
    // Predicated region
    $region14: #{bg_network_forward.1} parent=1 // pred_check
      _
    $region15: #{bg_network_forward.1} parent=1 // pred_check_branch
      %33 = sbr.rel (0) target = $region17
    $region16: #{bg_network_forward.1} parent=1 // pred_region
      %34 = dma.done [#allocation5], 128
    $region17: #{bg_network_forward.1} parent=1 // pred_fallthru
      _
    %v35 = vld [vmem:[#allocation2] sm:$0xff]
    %v36 = vld [vmem:[#allocation4] sm:$0xff]
    %v37 = vlaneseq
    %v38 = vand.u32 %v37, 127
    %vm39 = vcmp.lt.s32.totalorder %v38, 4
    %v40 = vmul.f32 %v36, 0.0001
    %v41 = vadd.f32 %v40, 0.5
    %v42 = vmul.f32 %v41, 100.0
    %v43 = vround.ne.pseudo %v42
    %v44 = vrcp.pop 100.0
    %v45 = vmul.f32 %v43, %v44
    %v46 = vsel %vm39, %v45, 0.0
    %v47 = vsub.f32 %v46, %v35
    %v48 = vsel %vm39, %v47, 0.0
    %50 = vset.pattern.permute.xlu0 8
    %51 = vperm.xlu0 %50, %v35
    %v52 = vpop.permute.xlu0 %51
    %v54 = vlaneseq
    %v55 = vshrl.u32 %v54, 7
    %v56 = vsub.s32 0, %v55
    %v57 = vrot.slane %v48, %v56
    %v58 = vmul.f32 %v52, %v57
    %v59 = vadd.f32 %v58, 0.0
    %60 = vset.pattern.permute.xlu0 9
    %61 = vperm.xlu0 %60, %v35
    %v62 = vpop.permute.xlu0 %61
    %v64 = vlaneseq
    %v65 = vshrl.u32 %v64, 7
    %v66 = vsub.s32 1, %v65
    %v67 = vrot.slane %v48, %v66
    %v68 = vmul.f32 %v62, %v67
    %v69 = vadd.f32 %v59, %v68
    %70 = vset.pattern.permute.xlu0 10
    %71 = vperm.xlu0 %70, %v35
    %v72 = vpop.permute.xlu0 %71
    %v74 = vlaneseq
    %v75 = vshrl.u32 %v74, 7
    %v76 = vsub.s32 2, %v75
    %v77 = vrot.slane %v48, %v76
    %v78 = vmul.f32 %v72, %v77
    %v79 = vadd.f32 %v69, %v78
    %80 = vset.pattern.permute.xlu0 11
    %81 = vperm.xlu0 %80, %v35
    %v82 = vpop.permute.xlu0 %81
    %v84 = vlaneseq
    %v85 = vshrl.u32 %v84, 7
    %v86 = vsub.s32 3, %v85
    %v87 = vrot.slane %v48, %v86
    %v88 = vmul.f32 %v82, %v87
    %v89 = vadd.f32 %v79, %v88
    %90 = vset.pattern.permute.xlu0 12
    %91 = vperm.xlu0 %90, %v35
    %v92 = vpop.permute.xlu0 %91
    %v94 = vlaneseq
    %v95 = vshrl.u32 %v94, 7
    %v96 = vsub.s32 4, %v95
    %v97 = vrot.slane %v48, %v96
    %v98 = vmul.f32 %v92, %v97
    %v99 = vadd.f32 %v89, %v98
    %100 = vset.pattern.permute.xlu0 13
    %101 = vperm.xlu0 %100, %v35
    %v102 = vpop.permute.xlu0 %101
    %v104 = vlaneseq
    %v105 = vshrl.u32 %v104, 7
    %v106 = vsub.s32 5, %v105
    %v107 = vrot.slane %v48, %v106
    %v108 = vmul.f32 %v102, %v107
    %v109 = vadd.f32 %v99, %v108
    %110 = vset.pattern.permute.xlu0 14
    %111 = vperm.xlu0 %110, %v35
    %v112 = vpop.permute.xlu0 %111
    %v114 = vlaneseq
    %v115 = vshrl.u32 %v114, 7
    %v116 = vsub.s32 6, %v115
    %v117 = vrot.slane %v48, %v116
    %v118 = vmul.f32 %v112, %v117
    %v119 = vadd.f32 %v109, %v118
    %120 = vset.pattern.permute.xlu0 15
    %121 = vperm.xlu0 %120, %v35
    %v122 = vpop.permute.xlu0 %121
    %v124 = vlaneseq
    %v125 = vshrl.u32 %v124, 7
    %v126 = vsub.s32 7, %v125
    %v127 = vrot.slane %v48, %v126
    %v128 = vmul.f32 %v122, %v127
    %v129 = vadd.f32 %v119, %v128
    %v130 = vsub.f32 0.0, %v129
    %v131 = vsel %vm39, %v130, -1.0
    %132 = vmax.xlane.f32.xlu0 %v131
    %v133 = vpop.xlane.xlu0 %132
    %v134 = vlaneseq
    %v135 = vshrl.u32 %v134, 7
    %v136 = vcvt.s32.f32 %v135
    %vm137 = vcmp.gt.f32.partialorder %v133, 0.0001
    %v138 = vsel %vm137, %v136, 8.0
    %v139 = vrot.slane %v138, 4
    %v140 = vmin.f32 %v138, %v139
    %v141 = vrot.slane %v140, 2
    %v142 = vmin.f32 %v140, %v141
    %v143 = vrot.slane %v142, 1
    %v144 = vmin.f32 %v142, %v143
    %s145 = vtos %v144
    %s146 = sadd.f32 %s145, 1.0
    %s147 = smin.f32 %s146, 8.0
    %s148 = smin.f32 %s145, 7.0
    %v149 = vstv %s148
    %vm150 = vcmp.eq.f32.partialorder %v136, %v149
    %v151 = vsel %vm150, 1, 0
    %v152 = vcvt.s32.f32 %v151
    %v153 = vmul.f32 %v130, %v152
    %v154 = vrot.slane %v153, 4
    %v155 = vadd.f32 %v153, %v154
    %v156 = vrot.slane %v155, 2
    %v157 = vadd.f32 %v155, %v156
    %v158 = vrot.slane %v157, 1
    %v159 = vadd.f32 %v157, %v158
    %v160 = vmul.f32 %v46, %v152
    %v161 = vrot.slane %v160, 4
    %v162 = vadd.f32 %v160, %v161
    %v163 = vrot.slane %v162, 2
    %v164 = vadd.f32 %v162, %v163
    %v165 = vrot.slane %v164, 1
    %v166 = vadd.f32 %v164, %v165
    %v167 = vsel %vm39, %v35, 0.0
    %vm168 = vcmp.eq.s32.totalorder %v38, 4
    %v169 = vsel %vm168, %v35, 0.0
    %vm170 = vcmp.eq.s32.totalorder %v38, 5
    %v171 = vstv %s147
    %v172 = vsel %vm170, %v171, 0.0
    %v173 = vadd.f32 %v169, %v172
    %vm174 = vcmp.eq.s32.totalorder %v135, 0
    %v175 = vsel %vm174, %v159, 0.0
    %vm176 = vcmp.eq.s32.totalorder %v135, 1
    %v177 = vlaneseq
    %v178 = vshrl.u32 %v177, 7
    %v179 = vsub.s32 0, %v178
    %v180 = vrot.slane %v167, %v179
    %v181 = vsel %vm176, %v180, 0.0
    %v182 = vadd.f32 %v175, %v181
    %vm183 = vcmp.eq.s32.totalorder %v135, 2
    %v184 = vsel %vm183, %v166, 0.0
    %v185 = vadd.f32 %v182, %v184
    %vm186 = vcmp.eq.s32.totalorder %v135, 3
    %v187 = vlaneseq
    %v188 = vshrl.u32 %v187, 7
    %v189 = vsub.s32 0, %v188
    %v190 = vrot.slane %v173, %v189
    %v191 = vsel %vm186, %v190, 0.0
    %v192 = vadd.f32 %v185, %v191
    %193 = vst [vmem:[%s2] sm:$0xff] %v192
    // Predicated region
    $region18: #{bg_network_forward.1} parent=1 // pred_check
      _
    $region19: #{bg_network_forward.1} parent=1 // pred_check_branch
      %195 = sbr.rel (0) target = $region21
    $region20: #{bg_network_forward.1} parent=1 // pred_region
      _
    $region21: #{bg_network_forward.1} parent=1 // pred_fallthru
      _
    // Predicated region
    $region22: #{bg_network_forward.1} parent=1 // pred_check
      _
    $region23: #{bg_network_forward.1} parent=1 // pred_check_branch
      %197 = sbr.rel (0) target = $region25
    $region24: #{bg_network_forward.1} parent=1 // pred_region
      _
    $region25: #{bg_network_forward.1} parent=1 // pred_fallthru
      _
    %198 = vsyncpa [#allocation3], 1
    %199 = vsyncpa [#allocation5], 1

</llo_original>
